<compile_context>
chip_gen: v7x
topology: tpu7x:2x2x1
jax: 0.10.0
libtpu: 0.0.40
codegen_flags: <defaults>
</compile_context>

<pallas_src>
import functools

import jax
import jax.numpy as jnp
from jax.experimental import pallas as pl
from jax.experimental.pallas import tpu as pltpu

_LANES = 128
_SUBLANES = 8


def _round_up(x, m):
    return ((x + m - 1) // m) * m


def decoder_kernel(x_ref, w1_ref, b1_ref, w2_ref, b2_ref, o_ref):
    # Cast x to bf16 in-kernel (avoids a separate XLA cast/copy pass over HBM).
    x = x_ref[...].astype(jnp.bfloat16)
    # Hidden layer: bf16 operands on the MXU, f32 accumulate; bias+ReLU in f32.
    h = jnp.dot(x, w1_ref[...], preferred_element_type=jnp.float32)
    h = jnp.maximum(h + b1_ref[...], 0.0)            # (tb, H_p) lane-dense VPU
    # Output layer: hidden -> bf16 for the MXU, f32 accumulate, bias + tanh.
    y = jnp.dot(h.astype(jnp.bfloat16), w2_ref[...],
                preferred_element_type=jnp.float32)
    y = y + b2_ref[...]
    o_ref[...] = jnp.tanh(y).astype(o_ref.dtype)     # tanh on EUP


@functools.partial(jax.jit, static_argnames=("block_b",))
def decoder_forward(x, w1, b1, w2, b2, *, block_b=1024):
    """x: (B, input_size) f32 -> (B, output_size) f32.  Weights stored
    transposed vs. nn.Linear, i.e. (in_features, out_features)."""
    B, D_in = x.shape
    H = w1.shape[1]
    D_out = w2.shape[1]
    assert w1.shape == (D_in, H)
    assert b1.shape == (1, H)
    assert w2.shape == (H, D_out)
    assert b2.shape == (1, D_out)

    # Lane-dense hidden: pad H (800) up to a multiple of 128 (-> 896).
    h_p = _round_up(H, _LANES)

    # Batch tile: multiple of 8 sublanes, capped by block_b, and aimed at
    # >= 2 tiles so v7x's two TensorCores both get work.
    tb = max(_SUBLANES,
             min(_round_up(block_b, _SUBLANES),
                 _round_up(pl.cdiv(B, 2), _SUBLANES)))
    b_p = _round_up(B, tb)
    n_tiles = b_p // tb

    # Only pad the batch when it does not divide the tile (keep f32; the bf16
    # cast happens inside the kernel).
    x_in = x if b_p == B else jnp.zeros((b_p, D_in), x.dtype).at[:B].set(x)

    # bf16 matmul operands (halves weight DMA bytes, native MXU input dtype);
    # biases stay f32 for the f32 elementwise epilogue.  Hidden-dim pads are
    # zero in both b1 columns and w2 rows (required for correctness).
    w1_p = jnp.zeros((D_in, h_p), jnp.bfloat16).at[:, :H].set(
        w1.astype(jnp.bfloat16))
    b1_p = jnp.zeros((1, h_p), jnp.float32).at[:, :H].set(
        b1.astype(jnp.float32))
    w2_p = jnp.zeros((h_p, D_out), jnp.bfloat16).at[:H, :].set(
        w2.astype(jnp.bfloat16))
    b2_f = b2.astype(jnp.float32)

    out_p = pl.pallas_call(
        decoder_kernel,
        out_shape=jax.ShapeDtypeStruct((b_p, D_out), jnp.float32),
        grid_spec=pl.GridSpec(
            grid=(n_tiles,),
            in_specs=[
                pl.BlockSpec((tb, D_in), lambda i: (i, 0)),    # x tile moves
                pl.BlockSpec((D_in, h_p), lambda i: (0, 0)),   # resident w1
                pl.BlockSpec((1, h_p), lambda i: (0, 0)),      # resident b1
                pl.BlockSpec((h_p, D_out), lambda i: (0, 0)),  # resident w2
                pl.BlockSpec((1, D_out), lambda i: (0, 0)),    # resident b2
            ],
            out_specs=pl.BlockSpec((tb, D_out), lambda i: (i, 0)),
        ),
        compiler_params=pltpu.CompilerParams(
            dimension_semantics=("parallel",),     # megacore sharding on v7x
            vmem_limit_bytes=48 * 1024 * 1024,     # headroom under v7x 64 MiB
        ),
    )(x_in, w1_p, b1_p, w2_p, b2_f)

    return out_p if b_p == B else out_p[:B]


def init_decoder_params(key, input_size, output_size, hidden=800):
    """Deterministic init mimicking nn.Linear default U(-1/sqrt(fan_in), +)."""
    k1, k2, k3, k4 = jax.random.split(key, 4)
    lim1 = 1.0 / jnp.sqrt(jnp.float32(input_size))
    lim2 = 1.0 / jnp.sqrt(jnp.float32(hidden))
    w1 = jax.random.uniform(k1, (input_size, hidden), jnp.float32, -lim1, lim1)
    b1 = jax.random.uniform(k2, (1, hidden), jnp.float32, -lim1, lim1)
    w2 = jax.random.uniform(k3, (hidden, output_size), jnp.float32, -lim2, lim2)
    b2 = jax.random.uniform(k4, (1, output_size), jnp.float32, -lim2, lim2)
    return w1, b1, w2, b2


if __name__ == "__main__":
    batch = 8
    input_size = 32       # latent dim fed into the VAE decoder
    output_size = 64      # small flattened-image size (not 128-aligned on purpose)

    key = jax.random.PRNGKey(0)
    kx, kp = jax.random.split(key)
    x = jax.random.normal(kx, (batch, input_size), jnp.float32)
    w1, b1, w2, b2 = init_decoder_params(kp, input_size, output_size)

    out = decoder_forward(x, w1, b1, w2, b2)
    out = jax.block_until_ready(out)

    # Reference in plain JAX (full-f32 math, same as the PyTorch module).
    ref = jnp.tanh(jnp.maximum(x @ w1 + b1, 0.0) @ w2 + b2)
    assert out.shape == (batch, output_size)
    # bf16 matmul operands -> loosened tolerance vs. the f32 reference.
    err = float(jnp.max(jnp.abs(out - ref)))
    assert jnp.allclose(out, ref, atol=5e-2, rtol=5e-2), err

    print("KERNEL_OK")
</pallas_src>

<mosaic_0001>
module attributes {stable_mosaic.version = 11 : i64} {
  func.func @decoder_kernel(%arg0: i32, %arg1: memref<8x32xf32, #tpu.memory_space<vmem>>, %arg2: memref<32x896xbf16, #tpu.memory_space<vmem>>, %arg3: memref<1x896xf32, #tpu.memory_space<vmem>>, %arg4: memref<896x64xbf16, #tpu.memory_space<vmem>>, %arg5: memref<1x64xf32, #tpu.memory_space<vmem>>, %arg6: memref<8x64xf32, #tpu.memory_space<vmem>>) attributes {dimension_semantics = [#tpu.dimension_semantics<parallel>], iteration_bounds = array<i64: 1>, scalar_prefetch = 0 : i64, scratch_operands = 0 : i64, tpu.core_type = #tpu.core_type<tc>, window_params = [{transform_indices = @transform_0, window_bounds = array<i64: 8, 32>}, {pipeline_mode = #tpu.pipeline_mode<synchronous>, transform_indices = @transform_1, window_bounds = array<i64: 32, 896>}, {pipeline_mode = #tpu.pipeline_mode<synchronous>, transform_indices = @transform_2, window_bounds = array<i64: 1, 896>}, {pipeline_mode = #tpu.pipeline_mode<synchronous>, transform_indices = @transform_3, window_bounds = array<i64: 896, 64>}, {pipeline_mode = #tpu.pipeline_mode<synchronous>, transform_indices = @transform_4, window_bounds = array<i64: 1, 64>}, {transform_indices = @transform_5, window_bounds = array<i64: 8, 64>}]} {
    %c0 = arith.constant 0 : index
    %c0_0 = arith.constant 0 : index
    %0 = vector.load %arg1[%c0, %c0_0] : memref<8x32xf32, #tpu.memory_space<vmem>>, vector<8x32xf32>
    %1 = arith.truncf %0 : vector<8x32xf32> to vector<8x32xbf16>
    %c0_1 = arith.constant 0 : index
    %c0_2 = arith.constant 0 : index
    %2 = vector.load %arg2[%c0_1, %c0_2] : memref<32x896xbf16, #tpu.memory_space<vmem>>, vector<32x896xbf16>
    %cst = arith.constant dense<0.000000e+00> : vector<8x896xf32>
    %3 = tpu.matmul %1, %2, %cst {dimension_numbers = #tpu.dot_dimension_numbers<[1], [0], [0], [1], [0, 0, 1, 1], [], []>} : vector<8x32xbf16>, vector<32x896xbf16>, vector<8x896xf32> -> vector<8x896xf32>
    %c0_3 = arith.constant 0 : index
    %c0_4 = arith.constant 0 : index
    %4 = vector.load %arg3[%c0_3, %c0_4] : memref<1x896xf32, #tpu.memory_space<vmem>>, vector<1x896xf32>
    %5 = vector.broadcast %4 : vector<1x896xf32> to vector<8x896xf32>
    %6 = arith.addf %3, %5 : vector<8x896xf32>
    %cst_5 = arith.constant 0.000000e+00 : f32
    %7 = vector.broadcast %cst_5 : f32 to vector<8x896xf32>
    %8 = arith.maximumf %6, %7 : vector<8x896xf32>
    %9 = arith.truncf %8 : vector<8x896xf32> to vector<8x896xbf16>
    %c0_6 = arith.constant 0 : index
    %c0_7 = arith.constant 0 : index
    %10 = vector.load %arg4[%c0_6, %c0_7] : memref<896x64xbf16, #tpu.memory_space<vmem>>, vector<896x64xbf16>
    %cst_8 = arith.constant dense<0.000000e+00> : vector<8x64xf32>
    %11 = tpu.matmul %9, %10, %cst_8 {dimension_numbers = #tpu.dot_dimension_numbers<[1], [0], [0], [1], [0, 0, 1, 1], [], []>} : vector<8x896xbf16>, vector<896x64xbf16>, vector<8x64xf32> -> vector<8x64xf32>
    %c0_9 = arith.constant 0 : index
    %c0_10 = arith.constant 0 : index
    %12 = vector.load %arg5[%c0_9, %c0_10] : memref<1x64xf32, #tpu.memory_space<vmem>>, vector<1x64xf32>
    %13 = vector.broadcast %12 : vector<1x64xf32> to vector<8x64xf32>
    %14 = arith.addf %11, %13 : vector<8x64xf32>
    %15 = math.tanh %14 : vector<8x64xf32>
    %c0_11 = arith.constant 0 : index
    %c0_12 = arith.constant 0 : index
    %16 = vector.load %arg6[%c0_11, %c0_12] : memref<8x64xf32, #tpu.memory_space<vmem>>, vector<8x64xf32>
    tpu.vector_store %arg6[%c0_11, %c0_12], %15 {strides = array<i32>} : memref<8x64xf32, #tpu.memory_space<vmem>>, vector<8x64xf32>,
    return
  }
  func.func @transform_0(%arg0: i32) -> (i32, i32) {
    %c0_i32 = arith.constant 0 : i32
    %c0_i32_0 = arith.constant 0 : i32
    return %arg0, %c0_i32 : i32, i32
  }
  func.func @transform_1(%arg0: i32) -> (i32, i32) {
    %c0_i32 = arith.constant 0 : i32
    %c0_i32_0 = arith.constant 0 : i32
    %c0_i32_1 = arith.constant 0 : i32
    return %c0_i32, %c0_i32_0 : i32, i32
  }
  func.func @transform_2(%arg0: i32) -> (i32, i32) {
    %c0_i32 = arith.constant 0 : i32
    %c0_i32_0 = arith.constant 0 : i32
    %c0_i32_1 = arith.constant 0 : i32
    return %c0_i32, %c0_i32_0 : i32, i32
  }
  func.func @transform_3(%arg0: i32) -> (i32, i32) {
    %c0_i32 = arith.constant 0 : i32
    %c0_i32_0 = arith.constant 0 : i32
    %c0_i32_1 = arith.constant 0 : i32
    return %c0_i32, %c0_i32_0 : i32, i32
  }
  func.func @transform_4(%arg0: i32) -> (i32, i32) {
    %c0_i32 = arith.constant 0 : i32
    %c0_i32_0 = arith.constant 0 : i32
    %c0_i32_1 = arith.constant 0 : i32
    return %c0_i32, %c0_i32_0 : i32, i32
  }
  func.func @transform_5(%arg0: i32) -> (i32, i32) {
    %c0_i32 = arith.constant 0 : i32
    %c0_i32_0 = arith.constant 0 : i32
    return %arg0, %c0_i32 : i32, i32
  }
}

</mosaic_0001>

<llo_original>
// kernel: decoder_forward.1
$region0: #{decoder_forward.1}
  #allocation0 [shape = 'u32[]', space=smem, size = 0x4, offset = 0x4, fixed_abs, tag = 'smem constant byte address 0x4 - core index']
  #allocation1 [shape = 'u32[144,128]{1,0:T(1,128)}', space=vmem, size = 0x12000, scoped, tag = 'internal scratch']
  %s0 = inlined_call_operand.vmem [shape: f32[8,32], index: 0, kind: input, shape index: {}]
  %s1 = inlined_call_operand.vmem [shape: bf16[32,896], index: 1, kind: input, shape index: {}]
  %s2 = inlined_call_operand.vmem [shape: f32[1,896], index: 2, kind: input, shape index: {}]
  %s3 = inlined_call_operand.vmem [shape: bf16[896,64], index: 3, kind: input, shape index: {}]
  %s4 = inlined_call_operand.vmem [shape: f32[1,64], index: 4, kind: input, shape index: {}]
  %s5 = inlined_call_operand.hbm [shape: f32[8,64], index: 5, kind: output, shape index: {}]
  %s6 = sld [smem:[#allocation0]]
  $region30: #{decoder_forward.1} parent=0
    _
  %s8 = ssub.s32 1, %s6
  %s9 = scalar_select 0, %s8, %s6
  $region1: #{decoder_forward.1} parent=0
    #allocation2 [shape = 'u8[4096]{0}', space=vmem, size = 0x1000, scoped, tag = 'output window, operand 0, single buffered']
    #allocation3 [shape = 's32[1]{0}', space=sflag, size = 0x4, scoped, tag = 'scoped memory for decoder_forward.1']
    %10 = vsyncpa [#allocation3], 0
    // Predicated region
    $region2: #{decoder_forward.1} parent=1 // pred_check
      _
    $region3: #{decoder_forward.1} parent=1 // pred_check_branch
      %12 = sbr.rel (0) target = $region5
    $region4: #{decoder_forward.1} parent=1 // pred_region
      _
    $region5: #{decoder_forward.1} parent=1 // pred_fallthru
      _
    // Predicated region
    $region6: #{decoder_forward.1} parent=1 // pred_check
      _
    $region7: #{decoder_forward.1} parent=1 // pred_check_branch
      %14 = sbr.rel (0) target = $region9
    $region8: #{decoder_forward.1} parent=1 // pred_region
      _
    $region9: #{decoder_forward.1} parent=1 // pred_fallthru
      _
    // Predicated region
    $region10: #{decoder_forward.1} parent=1 // pred_check
      _
    $region11: #{decoder_forward.1} parent=1 // pred_check_branch
      %16 = sbr.rel (0) target = $region13
    $region12: #{decoder_forward.1} parent=1 // pred_region
      _
    $region13: #{decoder_forward.1} parent=1 // pred_fallthru
      _
    // Predicated region
    $region14: #{decoder_forward.1} parent=1 // pred_check
      _
    $region15: #{decoder_forward.1} parent=1 // pred_check_branch
      %18 = sbr.rel (0) target = $region17
    $region16: #{decoder_forward.1} parent=1 // pred_region
      _
    $region17: #{decoder_forward.1} parent=1 // pred_fallthru
      _
    // Predicated region
    $region18: #{decoder_forward.1} parent=1 // pred_check
      _
    $region19: #{decoder_forward.1} parent=1 // pred_check_branch
      %20 = sbr.rel (0) target = $region21
    $region20: #{decoder_forward.1} parent=1 // pred_region
      _
    $region21: #{decoder_forward.1} parent=1 // pred_fallthru
      _
    %v22 = vld [vmem:[%s0] sm:$0xff]
    %v23 = vpack.c.bf16 %v22, %v22
    %v24 = vld [vmem:[%s1] sm:$0xff]
    %v25 = vld [vmem:[%s1 + $0x8] sm:$0xff]
    %v26 = vld [vmem:[%s1 + $0x10] sm:$0xff]
    %v27 = vld [vmem:[%s1 + $0x18] sm:$0xf]
    %v28 = vld [vmem:[%s1 + $0x1c] sm:$0xff]
    %v29 = vld [vmem:[%s1 + $0x24] sm:$0xff]
    %v30 = vld [vmem:[%s1 + $0x2c] sm:$0xff]
    %v31 = vld [vmem:[%s1 + $0x34] sm:$0xf]
    %v32 = vld [vmem:[%s1 + $0x38] sm:$0xff]
    %v33 = vld [vmem:[%s1 + $0x40] sm:$0xff]
    %v34 = vld [vmem:[%s1 + $0x48] sm:$0xff]
    %v35 = vld [vmem:[%s1 + $0x50] sm:$0xf]
    %v36 = vld [vmem:[%s1 + $0x54] sm:$0xff]
    %v37 = vld [vmem:[%s1 + $0x5c] sm:$0xff]
    %v38 = vld [vmem:[%s1 + $0x64] sm:$0xff]
    %v39 = vld [vmem:[%s1 + $0x6c] sm:$0xf]
    %v40 = vld [vmem:[%s2] sm:$0xff]
    %v42 = vlaneseq
    %v43 = vshrl.u32 %v42, 7
    %v44 = vsub.s32 0, %v43
    %v45 = vrot.slane %v40, %v44
    %v46 = vlaneseq
    %v47 = vshrl.u32 %v46, 7
    %v48 = vsub.s32 1, %v47
    %v49 = vrot.slane %v40, %v48
    %v50 = vlaneseq
    %v51 = vshrl.u32 %v50, 7
    %v52 = vsub.s32 2, %v51
    %v53 = vrot.slane %v40, %v52
    %v54 = vlaneseq
    %v55 = vshrl.u32 %v54, 7
    %v56 = vsub.s32 3, %v55
    %v57 = vrot.slane %v40, %v56
    %v58 = vlaneseq
    %v59 = vshrl.u32 %v58, 7
    %v60 = vsub.s32 4, %v59
    %v61 = vrot.slane %v40, %v60
    %v62 = vlaneseq
    %v63 = vshrl.u32 %v62, 7
    %v64 = vsub.s32 5, %v63
    %v65 = vrot.slane %v40, %v64
    %v66 = vlaneseq
    %v67 = vshrl.u32 %v66, 7
    %v68 = vsub.s32 6, %v67
    %v69 = vrot.slane %v40, %v68
    %v93 = vunpack.c.l.b16 %v24
    %v94 = vunpack.c.h.b16 %v24
    %v95 = vunpack.c.l.b16 %v25
    %v96 = vunpack.c.h.b16 %v25
    %v97 = vunpack.c.l.b16 %v26
    %v98 = vunpack.c.h.b16 %v26
    %v99 = vunpack.c.l.b16 %v27
    %v100 = vunpack.c.l.b16 %v28
    %v101 = vunpack.c.h.b16 %v28
    %v102 = vunpack.c.l.b16 %v29
    %v103 = vunpack.c.h.b16 %v29
    %v104 = vunpack.c.l.b16 %v30
    %v105 = vunpack.c.h.b16 %v30
    %v106 = vunpack.c.l.b16 %v31
    %v107 = vunpack.c.l.b16 %v32
    %v108 = vunpack.c.h.b16 %v32
    %v109 = vunpack.c.l.b16 %v33
    %v110 = vunpack.c.h.b16 %v33
    %v111 = vunpack.c.l.b16 %v34
    %v112 = vunpack.c.h.b16 %v34
    %v113 = vunpack.c.l.b16 %v35
    %v114 = vunpack.c.l.b16 %v36
    %v115 = vunpack.c.h.b16 %v36
    %v116 = vunpack.c.l.b16 %v37
    %v117 = vunpack.c.h.b16 %v37
    %v118 = vunpack.c.l.b16 %v38
    %v119 = vunpack.c.h.b16 %v38
    %v120 = vunpack.c.l.b16 %v39
    %v121 = vpack.c.b16 %v100, %v93
    %v122 = vpack.c.b16 %v101, %v94
    %v123 = vpack.c.b16 %v102, %v95
    %v124 = vpack.c.b16 %v103, %v96
    %v125 = vpack.c.b16 %v104, %v97
    %v126 = vpack.c.b16 %v105, %v98
    %v127 = vpack.c.b16 %v106, %v99
    %v128 = vpack.c.b16 %v114, %v107
    %v129 = vpack.c.b16 %v115, %v108
    %v130 = vpack.c.b16 %v116, %v109
    %v131 = vpack.c.b16 %v117, %v110
    %v132 = vpack.c.b16 %v118, %v111
    %v133 = vpack.c.b16 %v119, %v112
    %v134 = vpack.c.b16 %v120, %v113
    %vm149 = vcmask 261120
    %v151 = vsel %vm149, %v23, 0
    %153 = vmatprep.subr.bf16.mxu0 %v122
    %154 = vmatpush1.bf16.msra.mxu0 %v121
    %155 = vmatprep.subr.bf16.mxu0 %v129
    %156 = vmatpush1.bf16.msra.mxu0 %v128
    %157 = vmatprep.subr.bf16.mxu0 0
    %158 = vmatpush1.bf16.msra.mxu0 0
    %159 = vmatprep.subr.bf16.mxu0 0
    %160 = vmatpush1.bf16.msra.mxu0 0
    %161 = vmatprep.subr.bf16.mxu0 0
    %162 = vmatpush1.bf16.msra.mxu0 0
    %163 = vmatprep.subr.bf16.mxu0 0
    %164 = vmatpush1.bf16.msra.mxu0 0
    %165 = vmatprep.subr.bf16.mxu0 0
    %166 = vmatpush1.bf16.msra.mxu0 0
    %167 = vmatprep.subr.bf16.mxu0 0
    %168 = vmatpush1.bf16.msra.mxu0 0
    %169 = vmatprep.subr.bf16.mxu0 0
    %170 = vmatpush1.bf16.msra.mxu0 0
    %171 = vmatprep.subr.bf16.mxu0 0
    %172 = vmatpush1.bf16.msra.mxu0 0
    %173 = vmatprep.subr.bf16.mxu0 0
    %174 = vmatpush1.bf16.msra.mxu0 0
    %175 = vmatprep.subr.bf16.mxu0 0
    %176 = vmatpush1.bf16.msra.mxu0 0
    %177 = vmatprep.subr.bf16.mxu0 0
    %178 = vmatpush1.bf16.msra.mxu0 0
    %179 = vmatprep.subr.bf16.mxu0 0
    %180 = vmatpush1.bf16.msra.mxu0 0
    %181 = vmatprep.subr.bf16.mxu0 0
    %182 = vmatpush1.bf16.msra.mxu0 0
    %183 = vmatprep.subr.bf16.mxu0 0
    %184 = vmatpush1.bf16.msra.mxu0 0
    %185 = vmatprep.mubr.bf16.mxu0 0
    %186 = vmatmul.mubr.bf16.gmra.mrb[0].mxu0 %v151
    %v187 = vpop.f32.mrb[0].mxu0
    %v188 = vadd.f32 %v45, %v187
    %v189 = vpop.f32.mrb[0].mxu0
    %v190 = vadd.f32 %v49, %v189
    %v191 = vpop.f32.mrb[0].mxu0
    %v192 = vpop.f32.mrb[0].mxu0
    %193 = vdwg.mxu0
    %194 = vmatprep.subr.bf16.mxu0 %v124
    %195 = vmatpush1.bf16.msra.mxu0 %v123
    %196 = vmatprep.subr.bf16.mxu0 %v131
    %197 = vmatpush1.bf16.msra.mxu0 %v130
    %198 = vmatprep.subr.bf16.mxu0 0
    %199 = vmatpush1.bf16.msra.mxu0 0
    %200 = vmatprep.subr.bf16.mxu0 0
    %201 = vmatpush1.bf16.msra.mxu0 0
    %202 = vmatprep.subr.bf16.mxu0 0
    %203 = vmatpush1.bf16.msra.mxu0 0
    %204 = vmatprep.subr.bf16.mxu0 0
    %205 = vmatpush1.bf16.msra.mxu0 0
    %206 = vmatprep.subr.bf16.mxu0 0
    %207 = vmatpush1.bf16.msra.mxu0 0
    %208 = vmatprep.subr.bf16.mxu0 0
    %209 = vmatpush1.bf16.msra.mxu0 0
    %210 = vmatprep.subr.bf16.mxu0 0
    %211 = vmatpush1.bf16.msra.mxu0 0
    %212 = vmatprep.subr.bf16.mxu0 0
    %213 = vmatpush1.bf16.msra.mxu0 0
    %214 = vmatprep.subr.bf16.mxu0 0
    %215 = vmatpush1.bf16.msra.mxu0 0
    %216 = vmatprep.subr.bf16.mxu0 0
    %217 = vmatpush1.bf16.msra.mxu0 0
    %218 = vmatprep.subr.bf16.mxu0 0
    %219 = vmatpush1.bf16.msra.mxu0 0
    %220 = vmatprep.subr.bf16.mxu0 0
    %221 = vmatpush1.bf16.msra.mxu0 0
    %222 = vmatprep.subr.bf16.mxu0 0
    %223 = vmatpush1.bf16.msra.mxu0 0
    %224 = vmatprep.subr.bf16.mxu0 0
    %225 = vmatpush1.bf16.msra.mxu0 0
    %226 = vmatprep.mubr.bf16.mxu0 0
    %227 = vmatmul.mubr.bf16.gmra.mrb[0].mxu0 %v151
    %v228 = vpop.f32.mrb[0].mxu0
    %v229 = vadd.f32 %v53, %v228
    %v230 = vpop.f32.mrb[0].mxu0
    %v231 = vadd.f32 %v57, %v230
    %v232 = vpop.f32.mrb[0].mxu0
    %v233 = vpop.f32.mrb[0].mxu0
    %234 = vdwg.mxu0
    %235 = vmatprep.subr.bf16.mxu0 %v126
    %236 = vmatpush1.bf16.msra.mxu0 %v125
    %237 = vmatprep.subr.bf16.mxu0 %v133
    %238 = vmatpush1.bf16.msra.mxu0 %v132
    %239 = vmatprep.subr.bf16.mxu0 0
    %240 = vmatpush1.bf16.msra.mxu0 0
    %241 = vmatprep.subr.bf16.mxu0 0
    %242 = vmatpush1.bf16.msra.mxu0 0
    %243 = vmatprep.subr.bf16.mxu0 0
    %244 = vmatpush1.bf16.msra.mxu0 0
    %245 = vmatprep.subr.bf16.mxu0 0
    %246 = vmatpush1.bf16.msra.mxu0 0
    %247 = vmatprep.subr.bf16.mxu0 0
    %248 = vmatpush1.bf16.msra.mxu0 0
    %249 = vmatprep.subr.bf16.mxu0 0
    %250 = vmatpush1.bf16.msra.mxu0 0
    %251 = vmatprep.subr.bf16.mxu0 0
    %252 = vmatpush1.bf16.msra.mxu0 0
    %253 = vmatprep.subr.bf16.mxu0 0
    %254 = vmatpush1.bf16.msra.mxu0 0
    %255 = vmatprep.subr.bf16.mxu0 0
    %256 = vmatpush1.bf16.msra.mxu0 0
    %257 = vmatprep.subr.bf16.mxu0 0
    %258 = vmatpush1.bf16.msra.mxu0 0
    %259 = vmatprep.subr.bf16.mxu0 0
    %260 = vmatpush1.bf16.msra.mxu0 0
    %261 = vmatprep.subr.bf16.mxu0 0
    %262 = vmatpush1.bf16.msra.mxu0 0
    %263 = vmatprep.subr.bf16.mxu0 0
    %264 = vmatpush1.bf16.msra.mxu0 0
    %265 = vmatprep.subr.bf16.mxu0 0
    %266 = vmatpush1.bf16.msra.mxu0 0
    %267 = vmatprep.mubr.bf16.mxu0 0
    %268 = vmatmul.mubr.bf16.gmra.mrb[0].mxu0 %v151
    %v269 = vpop.f32.mrb[0].mxu0
    %v270 = vadd.f32 %v61, %v269
    %v271 = vpop.f32.mrb[0].mxu0
    %v272 = vadd.f32 %v65, %v271
    %v273 = vpop.f32.mrb[0].mxu0
    %v274 = vpop.f32.mrb[0].mxu0
    %275 = vdwg.mxu0
    %276 = vmatprep.subr.bf16.mxu0 0
    %277 = vmatpush1.bf16.msra.mxu0 %v127
    %278 = vmatprep.subr.bf16.mxu0 0
    %279 = vmatpush1.bf16.msra.mxu0 %v134
    %280 = vmatprep.subr.bf16.mxu0 0
    %281 = vmatpush1.bf16.msra.mxu0 0
    %282 = vmatprep.subr.bf16.mxu0 0
    %283 = vmatpush1.bf16.msra.mxu0 0
    %284 = vmatprep.subr.bf16.mxu0 0
    %285 = vmatpush1.bf16.msra.mxu0 0
    %286 = vmatprep.subr.bf16.mxu0 0
    %287 = vmatpush1.bf16.msra.mxu0 0
    %288 = vmatprep.subr.bf16.mxu0 0
    %289 = vmatpush1.bf16.msra.mxu0 0
    %290 = vmatprep.subr.bf16.mxu0 0
    %291 = vmatpush1.bf16.msra.mxu0 0
    %292 = vmatprep.subr.bf16.mxu0 0
    %293 = vmatpush1.bf16.msra.mxu0 0
    %294 = vmatprep.subr.bf16.mxu0 0
    %295 = vmatpush1.bf16.msra.mxu0 0
    %296 = vmatprep.subr.bf16.mxu0 0
    %297 = vmatpush1.bf16.msra.mxu0 0
    %298 = vmatprep.subr.bf16.mxu0 0
    %299 = vmatpush1.bf16.msra.mxu0 0
    %300 = vmatprep.subr.bf16.mxu0 0
    %301 = vmatpush1.bf16.msra.mxu0 0
    %302 = vmatprep.subr.bf16.mxu0 0
    %303 = vmatpush1.bf16.msra.mxu0 0
    %304 = vmatprep.subr.bf16.mxu0 0
    %305 = vmatpush1.bf16.msra.mxu0 0
    %306 = vmatprep.subr.bf16.mxu0 0
    %307 = vmatpush1.bf16.msra.mxu0 0
    %308 = vmatprep.mubr.bf16.mxu0 0
    %309 = vmatmul.mubr.bf16.gmra.mrb[0].mxu0 %v151
    %v310 = vpop.f32.mrb[0].mxu0
    %v311 = vadd.f32 %v69, %v310
    %v312 = vpop.f32.mrb[0].mxu0
    %v313 = vpop.f32.mrb[0].mxu0
    %v314 = vpop.f32.mrb[0].mxu0
    %315 = vdwg.mxu0
    %v316 = vmax.f32 %v188, 0.0
    %v317 = vmax.f32 %v190, 0.0
    %v318 = vmax.f32 %v229, 0.0
    %v319 = vmax.f32 %v231, 0.0
    %v320 = vmax.f32 %v270, 0.0
    %v321 = vmax.f32 %v272, 0.0
    %v322 = vmax.f32 %v311, 0.0
    %v323 = vpack.c.bf16 %v316, %v316
    %v324 = vpack.c.bf16 %v317, %v317
    %v325 = vpack.c.bf16 %v318, %v318
    %v326 = vpack.c.bf16 %v319, %v319
    %v327 = vpack.c.bf16 %v320, %v320
    %v328 = vpack.c.bf16 %v321, %v321
    %v329 = vpack.c.bf16 %v322, %v322
    %v330 = vld [vmem:[%s3] sm:$0xf]
    %v331 = vld [vmem:[%s3 + $0x4] sm:$0xf]
    %v332 = vld [vmem:[%s3 + $0x8] sm:$0xf]
    %v333 = vld [vmem:[%s3 + $0xc] sm:$0xf]
    %v334 = vld [vmem:[%s3 + $0x10] sm:$0xf]
    %v335 = vld [vmem:[%s3 + $0x14] sm:$0xf]
    %v336 = vld [vmem:[%s3 + $0x18] sm:$0xf]
    %v337 = vld [vmem:[%s3 + $0x1c] sm:$0xf]
    %v338 = vld [vmem:[%s3 + $0x20] sm:$0xf]
    %v339 = vld [vmem:[%s3 + $0x24] sm:$0xf]
    %v340 = vld [vmem:[%s3 + $0x28] sm:$0xf]
    %v341 = vld [vmem:[%s3 + $0x2c] sm:$0xf]
    %v342 = vld [vmem:[%s3 + $0x30] sm:$0xf]
    %v343 = vld [vmem:[%s3 + $0x34] sm:$0xf]
    %v344 = vld [vmem:[%s3 + $0x38] sm:$0xf]
    %v345 = vld [vmem:[%s3 + $0x3c] sm:$0xf]
    %v346 = vld [vmem:[%s3 + $0x40] sm:$0xf]
    %v347 = vld [vmem:[%s3 + $0x44] sm:$0xf]
    %v348 = vld [vmem:[%s3 + $0x48] sm:$0xf]
    %v349 = vld [vmem:[%s3 + $0x4c] sm:$0xf]
    %v350 = vld [vmem:[%s3 + $0x50] sm:$0xf]
    %v351 = vld [vmem:[%s3 + $0x54] sm:$0xf]
    %v352 = vld [vmem:[%s3 + $0x58] sm:$0xf]
    %v353 = vld [vmem:[%s3 + $0x5c] sm:$0xf]
    %v354 = vld [vmem:[%s3 + $0x60] sm:$0xf]
    %v355 = vld [vmem:[%s3 + $0x64] sm:$0xf]
    %v356 = vld [vmem:[%s3 + $0x68] sm:$0xf]
    %v357 = vld [vmem:[%s3 + $0x6c] sm:$0xf]
    %v358 = vld [vmem:[%s3 + $0x70] sm:$0xf]
    %v359 = vld [vmem:[%s3 + $0x74] sm:$0xf]
    %v360 = vld [vmem:[%s3 + $0x78] sm:$0xf]
    %v361 = vld [vmem:[%s3 + $0x7c] sm:$0xf]
    %v362 = vld [vmem:[%s3 + $0x80] sm:$0xf]
    %v363 = vld [vmem:[%s3 + $0x84] sm:$0xf]
    %v364 = vld [vmem:[%s3 + $0x88] sm:$0xf]
    %v365 = vld [vmem:[%s3 + $0x8c] sm:$0xf]
    %v366 = vld [vmem:[%s3 + $0x90] sm:$0xf]
    %v367 = vld [vmem:[%s3 + $0x94] sm:$0xf]
    %v368 = vld [vmem:[%s3 + $0x98] sm:$0xf]
    %v369 = vld [vmem:[%s3 + $0x9c] sm:$0xf]
    %v370 = vld [vmem:[%s3 + $0xa0] sm:$0xf]
    %v371 = vld [vmem:[%s3 + $0xa4] sm:$0xf]
    %v372 = vld [vmem:[%s3 + $0xa8] sm:$0xf]
    %v373 = vld [vmem:[%s3 + $0xac] sm:$0xf]
    %v374 = vld [vmem:[%s3 + $0xb0] sm:$0xf]
    %v375 = vld [vmem:[%s3 + $0xb4] sm:$0xf]
    %v376 = vld [vmem:[%s3 + $0xb8] sm:$0xf]
    %v377 = vld [vmem:[%s3 + $0xbc] sm:$0xf]
    %v378 = vld [vmem:[%s3 + $0xc0] sm:$0xf]
    %v379 = vld [vmem:[%s3 + $0xc4] sm:$0xf]
    %v380 = vld [vmem:[%s3 + $0xc8] sm:$0xf]
    %v381 = vld [vmem:[%s3 + $0xcc] sm:$0xf]
    %v382 = vld [vmem:[%s3 + $0xd0] sm:$0xf]
    %v383 = vld [vmem:[%s3 + $0xd4] sm:$0xf]
    %v384 = vld [vmem:[%s3 + $0xd8] sm:$0xf]
    %v385 = vld [vmem:[%s3 + $0xdc] sm:$0xf]
    %v386 = vld [vmem:[%s3 + $0xe0] sm:$0xf]
    %v387 = vld [vmem:[%s3 + $0xe4] sm:$0xf]
    %v388 = vld [vmem:[%s3 + $0xe8] sm:$0xf]
    %v389 = vld [vmem:[%s3 + $0xec] sm:$0xf]
    %v390 = vld [vmem:[%s3 + $0xf0] sm:$0xf]
    %v391 = vld [vmem:[%s3 + $0xf4] sm:$0xf]
    %v392 = vld [vmem:[%s3 + $0xf8] sm:$0xf]
    %v393 = vld [vmem:[%s3 + $0xfc] sm:$0xf]
    %v394 = vld [vmem:[%s3 + $0x100] sm:$0xf]
    %v395 = vld [vmem:[%s3 + $0x104] sm:$0xf]
    %v396 = vld [vmem:[%s3 + $0x108] sm:$0xf]
    %v397 = vld [vmem:[%s3 + $0x10c] sm:$0xf]
    %v398 = vld [vmem:[%s3 + $0x110] sm:$0xf]
    %v399 = vld [vmem:[%s3 + $0x114] sm:$0xf]
    %v400 = vld [vmem:[%s3 + $0x118] sm:$0xf]
    %v401 = vld [vmem:[%s3 + $0x11c] sm:$0xf]
    %v402 = vld [vmem:[%s3 + $0x120] sm:$0xf]
    %v403 = vld [vmem:[%s3 + $0x124] sm:$0xf]
    %v404 = vld [vmem:[%s3 + $0x128] sm:$0xf]
    %v405 = vld [vmem:[%s3 + $0x12c] sm:$0xf]
    %v406 = vld [vmem:[%s3 + $0x130] sm:$0xf]
    %v407 = vld [vmem:[%s3 + $0x134] sm:$0xf]
    %v408 = vld [vmem:[%s3 + $0x138] sm:$0xf]
    %v409 = vld [vmem:[%s3 + $0x13c] sm:$0xf]
    %v410 = vld [vmem:[%s3 + $0x140] sm:$0xf]
    %v411 = vld [vmem:[%s3 + $0x144] sm:$0xf]
    %v412 = vld [vmem:[%s3 + $0x148] sm:$0xf]
    %v413 = vld [vmem:[%s3 + $0x14c] sm:$0xf]
    %v414 = vld [vmem:[%s3 + $0x150] sm:$0xf]
    %v415 = vld [vmem:[%s3 + $0x154] sm:$0xf]
    %v416 = vld [vmem:[%s3 + $0x158] sm:$0xf]
    %v417 = vld [vmem:[%s3 + $0x15c] sm:$0xf]
    %v418 = vld [vmem:[%s3 + $0x160] sm:$0xf]
    %v419 = vld [vmem:[%s3 + $0x164] sm:$0xf]
    %v420 = vld [vmem:[%s3 + $0x168] sm:$0xf]
    %v421 = vld [vmem:[%s3 + $0x16c] sm:$0xf]
    %v422 = vld [vmem:[%s3 + $0x170] sm:$0xf]
    %v423 = vld [vmem:[%s3 + $0x174] sm:$0xf]
    %v424 = vld [vmem:[%s3 + $0x178] sm:$0xf]
    %v425 = vld [vmem:[%s3 + $0x17c] sm:$0xf]
    %v426 = vld [vmem:[%s3 + $0x180] sm:$0xf]
    %v427 = vld [vmem:[%s3 + $0x184] sm:$0xf]
    %v428 = vld [vmem:[%s3 + $0x188] sm:$0xf]
    %v429 = vld [vmem:[%s3 + $0x18c] sm:$0xf]
    %v430 = vld [vmem:[%s3 + $0x190] sm:$0xf]
    %v431 = vld [vmem:[%s3 + $0x194] sm:$0xf]
    %v432 = vld [vmem:[%s3 + $0x198] sm:$0xf]
    %v433 = vld [vmem:[%s3 + $0x19c] sm:$0xf]
    %v434 = vld [vmem:[%s3 + $0x1a0] sm:$0xf]
    %v435 = vld [vmem:[%s3 + $0x1a4] sm:$0xf]
    %v436 = vld [vmem:[%s3 + $0x1a8] sm:$0xf]
    %v437 = vld [vmem:[%s3 + $0x1ac] sm:$0xf]
    %v438 = vld [vmem:[%s3 + $0x1b0] sm:$0xf]
    %v439 = vld [vmem:[%s3 + $0x1b4] sm:$0xf]
    %v440 = vld [vmem:[%s3 + $0x1b8] sm:$0xf]
    %v441 = vld [vmem:[%s3 + $0x1bc] sm:$0xf]
    %v442 = vld [vmem:[%s4] sm:$0x1]
    %v444 = vlaneseq
    %v445 = vshrl.u32 %v444, 7
    %v446 = vsub.s32 0, %v445
    %v447 = vrot.slane %v442, %v446
    %v561 = vunpack.c.l.b16 %v330
    %v562 = vunpack.c.l.b16 %v331
    %v563 = vunpack.c.l.b16 %v332
    %v564 = vunpack.c.l.b16 %v333
    %v565 = vunpack.c.l.b16 %v334
    %v566 = vunpack.c.l.b16 %v335
    %v567 = vunpack.c.l.b16 %v336
    %v568 = vunpack.c.l.b16 %v337
    %v569 = vunpack.c.l.b16 %v338
    %v570 = vunpack.c.l.b16 %v339
    %v571 = vunpack.c.l.b16 %v340
    %v572 = vunpack.c.l.b16 %v341
    %v573 = vunpack.c.l.b16 %v342
    %v574 = vunpack.c.l.b16 %v343
    %v575 = vunpack.c.l.b16 %v344
    %v576 = vunpack.c.l.b16 %v345
    %v577 = vunpack.c.l.b16 %v346
    %v578 = vunpack.c.l.b16 %v347
    %v579 = vunpack.c.l.b16 %v348
    %v580 = vunpack.c.l.b16 %v349
    %v581 = vunpack.c.l.b16 %v350
    %v582 = vunpack.c.l.b16 %v351
    %v583 = vunpack.c.l.b16 %v352
    %v584 = vunpack.c.l.b16 %v353
    %v585 = vunpack.c.l.b16 %v354
    %v586 = vunpack.c.l.b16 %v355
    %v587 = vunpack.c.l.b16 %v356
    %v588 = vunpack.c.l.b16 %v357
    %v589 = vunpack.c.l.b16 %v358
    %v590 = vunpack.c.l.b16 %v359
    %v591 = vunpack.c.l.b16 %v360
    %v592 = vunpack.c.l.b16 %v361
    %v593 = vunpack.c.l.b16 %v362
    %v594 = vunpack.c.l.b16 %v363
    %v595 = vunpack.c.l.b16 %v364
    %v596 = vunpack.c.l.b16 %v365
    %v597 = vunpack.c.l.b16 %v366
    %v598 = vunpack.c.l.b16 %v367
    %v599 = vunpack.c.l.b16 %v368
    %v600 = vunpack.c.l.b16 %v369
    %v601 = vunpack.c.l.b16 %v370
    %v602 = vunpack.c.l.b16 %v371
    %v603 = vunpack.c.l.b16 %v372
    %v604 = vunpack.c.l.b16 %v373
    %v605 = vunpack.c.l.b16 %v374
    %v606 = vunpack.c.l.b16 %v375
    %v607 = vunpack.c.l.b16 %v376
    %v608 = vunpack.c.l.b16 %v377
    %v609 = vunpack.c.l.b16 %v378
    %v610 = vunpack.c.l.b16 %v379
    %v611 = vunpack.c.l.b16 %v380
    %v612 = vunpack.c.l.b16 %v381
    %v613 = vunpack.c.l.b16 %v382
    %v614 = vunpack.c.l.b16 %v383
    %v615 = vunpack.c.l.b16 %v384
    %v616 = vunpack.c.l.b16 %v385
    %v617 = vunpack.c.l.b16 %v386
    %v618 = vunpack.c.l.b16 %v387
    %v619 = vunpack.c.l.b16 %v388
    %v620 = vunpack.c.l.b16 %v389
    %v621 = vunpack.c.l.b16 %v390
    %v622 = vunpack.c.l.b16 %v391
    %v623 = vunpack.c.l.b16 %v392
    %v624 = vunpack.c.l.b16 %v393
    %v625 = vunpack.c.l.b16 %v394
    %v626 = vunpack.c.l.b16 %v395
    %v627 = vunpack.c.l.b16 %v396
    %v628 = vunpack.c.l.b16 %v397
    %v629 = vunpack.c.l.b16 %v398
    %v630 = vunpack.c.l.b16 %v399
    %v631 = vunpack.c.l.b16 %v400
    %v632 = vunpack.c.l.b16 %v401
    %v633 = vunpack.c.l.b16 %v402
    %v634 = vunpack.c.l.b16 %v403
    %v635 = vunpack.c.l.b16 %v404
    %v636 = vunpack.c.l.b16 %v405
    %v637 = vunpack.c.l.b16 %v406
    %v638 = vunpack.c.l.b16 %v407
    %v639 = vunpack.c.l.b16 %v408
    %v640 = vunpack.c.l.b16 %v409
    %v641 = vunpack.c.l.b16 %v410
    %v642 = vunpack.c.l.b16 %v411
    %v643 = vunpack.c.l.b16 %v412
    %v644 = vunpack.c.l.b16 %v413
    %v645 = vunpack.c.l.b16 %v414
    %v646 = vunpack.c.l.b16 %v415
    %v647 = vunpack.c.l.b16 %v416
    %v648 = vunpack.c.l.b16 %v417
    %v649 = vunpack.c.l.b16 %v418
    %v650 = vunpack.c.l.b16 %v419
    %v651 = vunpack.c.l.b16 %v420
    %v652 = vunpack.c.l.b16 %v421
    %v653 = vunpack.c.l.b16 %v422
    %v654 = vunpack.c.l.b16 %v423
    %v655 = vunpack.c.l.b16 %v424
    %v656 = vunpack.c.l.b16 %v425
    %v657 = vunpack.c.l.b16 %v426
    %v658 = vunpack.c.l.b16 %v427
    %v659 = vunpack.c.l.b16 %v428
    %v660 = vunpack.c.l.b16 %v429
    %v661 = vunpack.c.l.b16 %v430
    %v662 = vunpack.c.l.b16 %v431
    %v663 = vunpack.c.l.b16 %v432
    %v664 = vunpack.c.l.b16 %v433
    %v665 = vunpack.c.l.b16 %v434
    %v666 = vunpack.c.l.b16 %v435
    %v667 = vunpack.c.l.b16 %v436
    %v668 = vunpack.c.l.b16 %v437
    %v669 = vunpack.c.l.b16 %v438
    %v670 = vunpack.c.l.b16 %v439
    %v671 = vunpack.c.l.b16 %v440
    %v672 = vunpack.c.l.b16 %v441
    %v673 = vpack.c.b16 %v562, %v561
    %v674 = vpack.c.b16 %v564, %v563
    %v675 = vpack.c.b16 %v566, %v565
    %v676 = vpack.c.b16 %v568, %v567
    %v677 = vpack.c.b16 %v570, %v569
    %v678 = vpack.c.b16 %v572, %v571
    %v679 = vpack.c.b16 %v574, %v573
    %v680 = vpack.c.b16 %v576, %v575
    %v681 = vpack.c.b16 %v578, %v577
    %v682 = vpack.c.b16 %v580, %v579
    %v683 = vpack.c.b16 %v582, %v581
    %v684 = vpack.c.b16 %v584, %v583
    %v685 = vpack.c.b16 %v586, %v585
    %v686 = vpack.c.b16 %v588, %v587
    %v687 = vpack.c.b16 %v590, %v589
    %v688 = vpack.c.b16 %v592, %v591
    %v689 = vpack.c.b16 %v594, %v593
    %v690 = vpack.c.b16 %v596, %v595
    %v691 = vpack.c.b16 %v598, %v597
    %v692 = vpack.c.b16 %v600, %v599
    %v693 = vpack.c.b16 %v602, %v601
    %v694 = vpack.c.b16 %v604, %v603
    %v695 = vpack.c.b16 %v606, %v605
    %v696 = vpack.c.b16 %v608, %v607
    %v697 = vpack.c.b16 %v610, %v609
    %v698 = vpack.c.b16 %v612, %v611
    %v699 = vpack.c.b16 %v614, %v613
    %v700 = vpack.c.b16 %v616, %v615
    %v701 = vpack.c.b16 %v618, %v617
    %v702 = vpack.c.b16 %v620, %v619
    %v703 = vpack.c.b16 %v622, %v621
    %v704 = vpack.c.b16 %v624, %v623
    %v705 = vpack.c.b16 %v626, %v625
    %v706 = vpack.c.b16 %v628, %v627
    %v707 = vpack.c.b16 %v630, %v629
    %v708 = vpack.c.b16 %v632, %v631
    %v709 = vpack.c.b16 %v634, %v633
    %v710 = vpack.c.b16 %v636, %v635
    %v711 = vpack.c.b16 %v638, %v637
    %v712 = vpack.c.b16 %v640, %v639
    %v713 = vpack.c.b16 %v642, %v641
    %v714 = vpack.c.b16 %v644, %v643
    %v715 = vpack.c.b16 %v646, %v645
    %v716 = vpack.c.b16 %v648, %v647
    %v717 = vpack.c.b16 %v650, %v649
    %v718 = vpack.c.b16 %v652, %v651
    %v719 = vpack.c.b16 %v654, %v653
    %v720 = vpack.c.b16 %v656, %v655
    %v721 = vpack.c.b16 %v658, %v657
    %v722 = vpack.c.b16 %v660, %v659
    %v723 = vpack.c.b16 %v662, %v661
    %v724 = vpack.c.b16 %v664, %v663
    %v725 = vpack.c.b16 %v666, %v665
    %v726 = vpack.c.b16 %v668, %v667
    %v727 = vpack.c.b16 %v670, %v669
    %v728 = vpack.c.b16 %v672, %v671
    %785 = vmatprep.subr.bf16.mxu0 0
    %786 = vmatpush1.bf16.msra.mxu0 %v673
    %787 = vmatprep.subr.bf16.mxu0 0
    %788 = vmatpush1.bf16.msra.mxu0 %v674
    %789 = vmatprep.subr.bf16.mxu0 0
    %790 = vmatpush1.bf16.msra.mxu0 %v675
    %791 = vmatprep.subr.bf16.mxu0 0
    %792 = vmatpush1.bf16.msra.mxu0 %v676
    %793 = vmatprep.subr.bf16.mxu0 0
    %794 = vmatpush1.bf16.msra.mxu0 %v677
    %795 = vmatprep.subr.bf16.mxu0 0
    %796 = vmatpush1.bf16.msra.mxu0 %v678
    %797 = vmatprep.subr.bf16.mxu0 0
    %798 = vmatpush1.bf16.msra.mxu0 %v679
    %799 = vmatprep.subr.bf16.mxu0 0
    %800 = vmatpush1.bf16.msra.mxu0 %v680
    %801 = vmatprep.subr.bf16.mxu0 0
    %802 = vmatpush1.bf16.msra.mxu0 %v681
    %803 = vmatprep.subr.bf16.mxu0 0
    %804 = vmatpush1.bf16.msra.mxu0 %v682
    %805 = vmatprep.subr.bf16.mxu0 0
    %806 = vmatpush1.bf16.msra.mxu0 %v683
    %807 = vmatprep.subr.bf16.mxu0 0
    %808 = vmatpush1.bf16.msra.mxu0 %v684
    %809 = vmatprep.subr.bf16.mxu0 0
    %810 = vmatpush1.bf16.msra.mxu0 %v685
    %811 = vmatprep.subr.bf16.mxu0 0
    %812 = vmatpush1.bf16.msra.mxu0 %v686
    %813 = vmatprep.subr.bf16.mxu0 0
    %814 = vmatpush1.bf16.msra.mxu0 %v687
    %815 = vmatprep.subr.bf16.mxu0 0
    %816 = vmatpush1.bf16.msra.mxu0 %v688
    %817 = vmatprep.mubr.bf16.mxu0 %v324
    %818 = vmatmul.mubr.bf16.gmra.mrb[0].mxu0 %v323
    %v819 = vpop.f32.mrb[0].mxu0
    %v820 = vadd.f32 %v447, %v819
    %v821 = vpop.f32.mrb[0].mxu0
    %v822 = vpop.f32.mrb[0].mxu0
    %v823 = vpop.f32.mrb[0].mxu0
    %824 = vdwg.mxu0
    %825 = vmatprep.subr.bf16.mxu0 0
    %826 = vmatpush1.bf16.msra.mxu0 %v689
    %827 = vmatprep.subr.bf16.mxu0 0
    %828 = vmatpush1.bf16.msra.mxu0 %v690
    %829 = vmatprep.subr.bf16.mxu0 0
    %830 = vmatpush1.bf16.msra.mxu0 %v691
    %831 = vmatprep.subr.bf16.mxu0 0
    %832 = vmatpush1.bf16.msra.mxu0 %v692
    %833 = vmatprep.subr.bf16.mxu0 0
    %834 = vmatpush1.bf16.msra.mxu0 %v693
    %835 = vmatprep.subr.bf16.mxu0 0
    %836 = vmatpush1.bf16.msra.mxu0 %v694
    %837 = vmatprep.subr.bf16.mxu0 0
    %838 = vmatpush1.bf16.msra.mxu0 %v695
    %839 = vmatprep.subr.bf16.mxu0 0
    %840 = vmatpush1.bf16.msra.mxu0 %v696
    %841 = vmatprep.subr.bf16.mxu0 0
    %842 = vmatpush1.bf16.msra.mxu0 %v697
    %843 = vmatprep.subr.bf16.mxu0 0
    %844 = vmatpush1.bf16.msra.mxu0 %v698
    %845 = vmatprep.subr.bf16.mxu0 0
    %846 = vmatpush1.bf16.msra.mxu0 %v699
    %847 = vmatprep.subr.bf16.mxu0 0
    %848 = vmatpush1.bf16.msra.mxu0 %v700
    %849 = vmatprep.subr.bf16.mxu0 0
    %850 = vmatpush1.bf16.msra.mxu0 %v701
    %851 = vmatprep.subr.bf16.mxu0 0
    %852 = vmatpush1.bf16.msra.mxu0 %v702
    %853 = vmatprep.subr.bf16.mxu0 0
    %854 = vmatpush1.bf16.msra.mxu0 %v703
    %855 = vmatprep.subr.bf16.mxu0 0
    %856 = vmatpush1.bf16.msra.mxu0 %v704
    %857 = vmatprep.mubr.bf16.mxu0 %v326
    %858 = vmatmul.mubr.bf16.gmra.mrb[0].mxu0 %v325
    %v859 = vpop.f32.mrb[0].mxu0
    %v860 = vadd.f32 %v820, %v859
    %v861 = vpop.f32.mrb[0].mxu0
    %v862 = vpop.f32.mrb[0].mxu0
    %v863 = vpop.f32.mrb[0].mxu0
    %864 = vdwg.mxu0
    %865 = vmatprep.subr.bf16.mxu0 0
    %866 = vmatpush1.bf16.msra.mxu0 %v705
    %867 = vmatprep.subr.bf16.mxu0 0
    %868 = vmatpush1.bf16.msra.mxu0 %v706
    %869 = vmatprep.subr.bf16.mxu0 0
    %870 = vmatpush1.bf16.msra.mxu0 %v707
    %871 = vmatprep.subr.bf16.mxu0 0
    %872 = vmatpush1.bf16.msra.mxu0 %v708
    %873 = vmatprep.subr.bf16.mxu0 0
    %874 = vmatpush1.bf16.msra.mxu0 %v709
    %875 = vmatprep.subr.bf16.mxu0 0
    %876 = vmatpush1.bf16.msra.mxu0 %v710
    %877 = vmatprep.subr.bf16.mxu0 0
    %878 = vmatpush1.bf16.msra.mxu0 %v711
    %879 = vmatprep.subr.bf16.mxu0 0
    %880 = vmatpush1.bf16.msra.mxu0 %v712
    %881 = vmatprep.subr.bf16.mxu0 0
    %882 = vmatpush1.bf16.msra.mxu0 %v713
    %883 = vmatprep.subr.bf16.mxu0 0
    %884 = vmatpush1.bf16.msra.mxu0 %v714
    %885 = vmatprep.subr.bf16.mxu0 0
    %886 = vmatpush1.bf16.msra.mxu0 %v715
    %887 = vmatprep.subr.bf16.mxu0 0
    %888 = vmatpush1.bf16.msra.mxu0 %v716
    %889 = vmatprep.subr.bf16.mxu0 0
    %890 = vmatpush1.bf16.msra.mxu0 %v717
    %891 = vmatprep.subr.bf16.mxu0 0
    %892 = vmatpush1.bf16.msra.mxu0 %v718
    %893 = vmatprep.subr.bf16.mxu0 0
    %894 = vmatpush1.bf16.msra.mxu0 %v719
    %895 = vmatprep.subr.bf16.mxu0 0
    %896 = vmatpush1.bf16.msra.mxu0 %v720
    %897 = vmatprep.mubr.bf16.mxu0 %v328
    %898 = vmatmul.mubr.bf16.gmra.mrb[0].mxu0 %v327
    %v899 = vpop.f32.mrb[0].mxu0
    %v900 = vadd.f32 %v860, %v899
    %v901 = vpop.f32.mrb[0].mxu0
    %v902 = vpop.f32.mrb[0].mxu0
    %v903 = vpop.f32.mrb[0].mxu0
    %904 = vdwg.mxu0
    %905 = vmatprep.subr.bf16.mxu0 0
    %906 = vmatpush1.bf16.msra.mxu0 %v721
    %907 = vmatprep.subr.bf16.mxu0 0
    %908 = vmatpush1.bf16.msra.mxu0 %v722
    %909 = vmatprep.subr.bf16.mxu0 0
    %910 = vmatpush1.bf16.msra.mxu0 %v723
    %911 = vmatprep.subr.bf16.mxu0 0
    %912 = vmatpush1.bf16.msra.mxu0 %v724
    %913 = vmatprep.subr.bf16.mxu0 0
    %914 = vmatpush1.bf16.msra.mxu0 %v725
    %915 = vmatprep.subr.bf16.mxu0 0
    %916 = vmatpush1.bf16.msra.mxu0 %v726
    %917 = vmatprep.subr.bf16.mxu0 0
    %918 = vmatpush1.bf16.msra.mxu0 %v727
    %919 = vmatprep.subr.bf16.mxu0 0
    %920 = vmatpush1.bf16.msra.mxu0 %v728
    %921 = vmatprep.subr.bf16.mxu0 0
    %922 = vmatpush1.bf16.msra.mxu0 0
    %923 = vmatprep.subr.bf16.mxu0 0
    %924 = vmatpush1.bf16.msra.mxu0 0
    %925 = vmatprep.subr.bf16.mxu0 0
    %926 = vmatpush1.bf16.msra.mxu0 0
    %927 = vmatprep.subr.bf16.mxu0 0
    %928 = vmatpush1.bf16.msra.mxu0 0
    %929 = vmatprep.subr.bf16.mxu0 0
    %930 = vmatpush1.bf16.msra.mxu0 0
    %931 = vmatprep.subr.bf16.mxu0 0
    %932 = vmatpush1.bf16.msra.mxu0 0
    %933 = vmatprep.subr.bf16.mxu0 0
    %934 = vmatpush1.bf16.msra.mxu0 0
    %935 = vmatprep.subr.bf16.mxu0 0
    %936 = vmatpush1.bf16.msra.mxu0 0
    %937 = vmatprep.mubr.bf16.mxu0 0
    %938 = vmatmul.mubr.bf16.gmra.mrb[0].mxu0 %v329
    %v939 = vpop.f32.mrb[0].mxu0
    %v940 = vadd.f32 %v900, %v939
    %v941 = vpop.f32.mrb[0].mxu0
    %v942 = vpop.f32.mrb[0].mxu0
    %v943 = vpop.f32.mrb[0].mxu0
    %944 = vdwg.mxu0
    %v945 = vtanh.pop %v940
    %vm946 = vcmask 523264
    %947 = vst.msk [vmem:[#allocation2] sm:$0xff] %vm946, %v945
    // Predicated region
    $region22: #{decoder_forward.1} parent=1 // pred_check
      _
    $region23: #{decoder_forward.1} parent=1 // pred_check_branch
      %949 = sbr.rel (0) target = $region25
    $region24: #{decoder_forward.1} parent=1 // pred_region
      %s951 = ssub.s32 128, 128
      %952 = vsyncadd [#allocation3], %s951
      %s954 = sshll.u32 [#allocation2], 4
      %s955 = int_to_ptr.vmem [resolvable:$true] %s954
      %957 = dma.vmem_to_hbm [thread:$0]  %s955, 128, %s5, [#allocation3]
    $region25: #{decoder_forward.1} parent=1 // pred_fallthru
      _
    // Predicated region
    $region26: #{decoder_forward.1} parent=1 // pred_check
      _
    $region27: #{decoder_forward.1} parent=1 // pred_check_branch
      %959 = sbr.rel (0) target = $region29
    $region28: #{decoder_forward.1} parent=1 // pred_region
      %960 = dma.done [#allocation3], 128
    $region29: #{decoder_forward.1} parent=1 // pred_fallthru
      _
    %961 = vsyncpa [#allocation3], 1

</llo_original>
